<compile_context>
chip_gen: v7x
topology: tpu7x:2x2x1
jax: 0.10.0
libtpu: 0.0.40
codegen_flags: <defaults>
</compile_context>

<pallas_src>
import functools

import jax
import jax.numpy as jnp
from jax.experimental import pallas as pl
from jax.experimental.pallas import tpu as pltpu

_LANE = 128
_SUBLANE = 8


def _accumulate(x_ref, lab_ref, out_ref, valid):
    """Add this tile's [intersection, pred_sum, label_sum] partials to out_ref.

    x_ref:   (1, C, s_blk, 128) logits block (native dtype, upcast here)
    lab_ref: (1, 1, s_blk, 128) integer labels block (native int dtype)
    out_ref: (1, 3*C, s_acc, 128) f32 lane/sublane-dense partial accumulator
    valid:   None (interior tile) or (s_blk, 128) bool mask for the ragged tail
    """
    C = x_ref.shape[1]
    s_blk = x_ref.shape[2]
    s_acc = out_ref.shape[2]

    # Per-class logits as full (s_blk, 128) slabs -> full vreg occupancy even
    # for C < 8; the channel max/sum below are plain element-wise VPU ops.
    xs = []
    for c in range(C):
        xc = x_ref[0, c].astype(jnp.float32)
        if valid is not None:
            # Zero garbage logits so exp / reciprocal stay finite.
            xc = jnp.where(valid, xc, 0.0)
        xs.append(xc)

    m = xs[0]
    for c in range(1, C):
        m = jnp.maximum(m, xs[c])
    es = [jnp.exp(xs[c] - m) for c in range(C)]
    denom = es[0]
    for c in range(1, C):
        denom = denom + es[c]

    r = pl.reciprocal(denom, approx=True)     # EUP slot
    r = r * (2.0 - denom * r)                 # one Newton step -> ~f32 accuracy
    if valid is not None:
        r = jnp.where(valid, r, 0.0)          # softmax prob -> 0 at padding

    lab = lab_ref[0, 0].astype(jnp.int32)     # (s_blk, 128)
    if valid is not None:
        lab = jnp.where(valid, lab, -1)       # garbage labels match no class

    def fold(v):
        # (s_blk, 128) -> (s_acc, 128) using only vreg-aligned element-wise
        # adds (slices sit on 8-sublane boundaries); no XLU work per tile.
        acc = v[0:s_acc]
        for g in range(1, s_blk // s_acc):
            acc = acc + v[g * s_acc:(g + 1) * s_acc]
        return acc

    for c in range(C):                        # static unroll; C is small
        pc = es[c] * r                        # softmax prob of class c
        oh = (lab == c).astype(jnp.float32)   # one-hot row, never hits HBM
        out_ref[0, c] += fold(pc * oh)        # intersection
        out_ref[0, C + c] += fold(pc)         # prediction sum
        out_ref[0, 2 * C + c] += fold(oh)     # label (one-hot) sum


def _dice_stats_kernel(x_ref, lab_ref, out_ref, *, n_s, n_tiles, full_tiles, hw):
    chunk = pl.program_id(1)
    s = pl.program_id(2)

    @pl.when(s == 0)
    def _():
        out_ref[...] = jnp.zeros_like(out_ref)

    if full_tiles >= n_tiles:
        # H*W is an exact multiple of the tile: mask-free path everywhere.
        _accumulate(x_ref, lab_ref, out_ref, None)
    else:
        s_blk = x_ref.shape[2]
        ts = s_blk * _LANE
        t = chunk * n_s + s                   # global spatial-tile index

        if full_tiles > 0:
            @pl.when(t < full_tiles)
            def _():
                _accumulate(x_ref, lab_ref, out_ref, None)

        @pl.when(t >= full_tiles)
        def _():
            row = jax.lax.broadcasted_iota(jnp.int32, (s_blk, _LANE), 0)
            lane = jax.lax.broadcasted_iota(jnp.int32, (s_blk, _LANE), 1)
            valid = (t * ts + row * _LANE + lane) < hw
            _accumulate(x_ref, lab_ref, out_ref, valid)


def _choose_block_rows(s_total, c, itemsize, block_pixels):
    """Sublane rows (of 128 lanes each) per spatial tile."""
    if block_pixels is None:
        # ~2 MiB of logits per block: amortizes per-step overhead, and with
        # double buffering + f32 temporaries stays well inside VMEM on
        # v5e / v6e / v7x under the 32 MiB scoped limit set below.
        rows = (2 << 20) // max(1, c * _LANE * itemsize)
    else:
        rows = max(_SUBLANE, block_pixels // _LANE)
    if rows >= s_total:
        # Single spatial tile unless that would break the 8-sublane fold.
        if s_total <= _SUBLANE or s_total % _SUBLANE == 0:
            return s_total
        return max(_SUBLANE, s_total // _SUBLANE * _SUBLANE)
    # Tiled: multiple of 32 sublanes (also satisfies int8 label packing).
    return max(32, rows // 32 * 32)


@functools.partial(
    jax.jit,
    static_argnames=("epsilon", "from_label", "to_label", "block_pixels"))
def dice_loss(inputs, labels, epsilon=1e-10, from_label=1, to_label=-1,
              block_pixels=None):
    """Forward pass of the PyTorch DiceLoss module (to_label is unused there too)."""
    N, C, H, W = inputs.shape
    HW = H * W
    s_total = pl.cdiv(HW, _LANE)              # spatial rows of 128 lanes
    hw_128 = s_total * _LANE

    # Keep a narrow incoming label dtype (less HBM traffic); upcast to int32
    # only after the VMEM load inside the kernel.
    if labels.dtype in (jnp.dtype(jnp.int8), jnp.dtype(jnp.int16)):
        lab_dt = labels.dtype
    else:
        lab_dt = jnp.dtype(jnp.int32)

    s_blk = _choose_block_rows(s_total, C, inputs.dtype.itemsize, block_pixels)
    # Sub-32-bit label blocks must respect their sublane packing when tiled.
    packing = {1: 32, 2: 16, 4: 8}[lab_dt.itemsize]
    if s_blk != s_total and s_blk % packing != 0:
        lab_dt = jnp.dtype(jnp.int32)

    x = inputs.reshape(N, C, HW)              # free, native dtype stays in HBM
    lab = labels.reshape(N, 1, HW).astype(lab_dt)
    if hw_128 != HW:
        # Only when H*W is not a multiple of 128 (at most 127 elements/row);
        # padded pixels are masked out inside the kernel.
        # TODO(synk): a flat-layout fallback kernel would avoid this extra pass.
        x = jnp.pad(x, ((0, 0), (0, 0), (0, hw_128 - HW)))
        lab = jnp.pad(lab, ((0, 0), (0, 0), (0, hw_128 - HW)))
    x = x.reshape(N, C, s_total, _LANE)
    lab = lab.reshape(N, 1, s_total, _LANE)

    n_tiles = pl.cdiv(s_total, s_blk)
    full_tiles = HW // (s_blk * _LANE)        # tiles needing no tail mask
    # Second "parallel" axis so both v7x TensorCores are used even for N == 1.
    n_chunks = 2 if (n_tiles >= 2 and n_tiles % 2 == 0) else 1
    n_s = n_tiles // n_chunks
    if s_blk % 32 == 0:
        s_acc = 32
    elif s_blk % _SUBLANE == 0:
        s_acc = _SUBLANE
    else:
        s_acc = s_blk

    kernel = functools.partial(
        _dice_stats_kernel,
        n_s=n_s, n_tiles=n_tiles, full_tiles=full_tiles, hw=HW)

    stats = pl.pallas_call(
        kernel,
        out_shape=jax.ShapeDtypeStruct(
            (N * n_chunks, 3 * C, s_acc, _LANE), jnp.float32),
        grid=(N, n_chunks, n_s),
        in_specs=[
            pl.BlockSpec((1, C, s_blk, _LANE),
                         lambda n, c, s: (n, 0, c * n_s + s, 0)),
            pl.BlockSpec((1, 1, s_blk, _LANE),
                         lambda n, c, s: (n, 0, c * n_s + s, 0)),
        ],
        out_specs=pl.BlockSpec((1, 3 * C, s_acc, _LANE),
                               lambda n, c, s: (n * n_chunks + c, 0, 0, 0)),
        compiler_params=pltpu.CompilerParams(
            dimension_semantics=("parallel", "parallel", "arbitrary"),
            vmem_limit_bytes=32 * 1024 * 1024,
        ),
    )(x, lab)

    # Tiny final reduction + dice ratio in plain JAX on the (N, 3, C) stats.
    stats = stats.reshape(N, n_chunks, 3, C, s_acc, _LANE).sum(axis=(1, 4, 5))
    inter, psum, lsum = stats[:, 0], stats[:, 1], stats[:, 2]
    dices_per_subj = 2.0 * inter / (psum + lsum + epsilon)   # (N, C)
    return 1.0 - jnp.mean(dices_per_subj[:, from_label:])


def _reference_dice_loss(inputs, labels, epsilon=1e-10, from_label=1):
    """Pure-JAX mirror of the PyTorch module, for correctness checks."""
    n, c = inputs.shape[0], inputs.shape[1]
    p = jax.nn.softmax(inputs.astype(jnp.float32), axis=1)
    onehot = jax.nn.one_hot(
        labels.reshape(n, *inputs.shape[2:]).astype(jnp.int32), c,
        dtype=jnp.float32)
    onehot = jnp.moveaxis(onehot, -1, 1)
    inter = jnp.sum(p * onehot, axis=(2, 3))
    l = jnp.sum(p, axis=(2, 3))
    r = jnp.sum(onehot, axis=(2, 3))
    dices = 2.0 * inter / (l + r + epsilon)
    return 1.0 - jnp.mean(dices[:, from_label:])


if __name__ == "__main__":
    key = jax.random.PRNGKey(0)

    cases = [
        # (N, C, H, W, label_dtype, block_pixels)
        (2, 4, 16, 16, jnp.int32, None),    # primary shape from the spec
        (1, 3, 17, 19, jnp.int32, None),    # H*W not a multiple of 128 (ragged)
        (2, 4, 128, 128, jnp.int8, 4096),   # multi-tile + 2-way chunking + int8 labels
        (1, 4, 72, 72, jnp.int32, 4096),    # chunking + ragged tail tile
    ]
    for idx, (n, c, h, w, ldt, bp) in enumerate(cases):
        k1, k2 = jax.random.split(jax.random.fold_in(key, idx))
        inputs = jax.random.normal(k1, (n, c, h, w), dtype=jnp.float32)
        labels = jax.random.randint(k2, (n, 1, h, w), 0, c, dtype=jnp.int32)
        labels = labels.astype(ldt)

        loss = jax.block_until_ready(dice_loss(inputs, labels, block_pixels=bp))
        ref = _reference_dice_loss(inputs, labels)
        assert jnp.allclose(loss, ref, atol=1e-5, rtol=1e-5), (idx, loss, ref)

    print("KERNEL_OK")
</pallas_src>

<mosaic_0001>
module attributes {stable_mosaic.version = 11 : i64} {
  func.func @_dice_stats_kernel(%arg0: i32, %arg1: i32, %arg2: i32, %arg3: memref<1x4x2x128xf32, #tpu.memory_space<vmem>>, %arg4: memref<1x1x2x128xi32, #tpu.memory_space<vmem>>, %arg5: memref<1x12x2x128xf32, #tpu.memory_space<vmem>>) attributes {dimension_semantics = [#tpu.dimension_semantics<parallel>, #tpu.dimension_semantics<parallel>, #tpu.dimension_semantics<arbitrary>], iteration_bounds = array<i64: 2, 1, 1>, scalar_prefetch = 0 : i64, scratch_operands = 0 : i64, tpu.core_type = #tpu.core_type<tc>, window_params = [{transform_indices = @transform_0, window_bounds = array<i64: 1, 4, 2, 128>}, {transform_indices = @transform_1, window_bounds = array<i64: 1, 1, 2, 128>}, {transform_indices = @transform_2, window_bounds = array<i64: 1, 12, 2, 128>}]} {
    %c0_i32 = arith.constant 0 : i32
    %0 = arith.cmpi eq, %arg2, %c0_i32 : i32
    %1 = arith.extui %0 : i1 to i32
    %c0_i32_0 = arith.constant 0 : i32
    %2 = arith.cmpi ne, %1, %c0_i32_0 : i32
    scf.if %2 {
      %cst_106 = arith.constant 0.000000e+00 : f32
      %128 = vector.broadcast %cst_106 : f32 to vector<1x12x2x128xf32>
      %c0_107 = arith.constant 0 : index
      %c0_108 = arith.constant 0 : index
      %c0_109 = arith.constant 0 : index
      %c0_110 = arith.constant 0 : index
      %129 = vector.load %arg5[%c0_107, %c0_108, %c0_109, %c0_110] : memref<1x12x2x128xf32, #tpu.memory_space<vmem>>, vector<1x12x2x128xf32>
      tpu.vector_store %arg5[%c0_107, %c0_108, %c0_109, %c0_110], %128 {strides = array<i32>} : memref<1x12x2x128xf32, #tpu.memory_space<vmem>>, vector<1x12x2x128xf32>,
    } else {
    }
    %c0 = arith.constant 0 : index
    %c0_1 = arith.constant 0 : index
    %c0_2 = arith.constant 0 : index
    %c0_3 = arith.constant 0 : index
    %3 = vector.load %arg3[%c0, %c0_1, %c0_2, %c0_3] : memref<1x4x2x128xf32, #tpu.memory_space<vmem>>, vector<1x1x2x128xf32>
    %4 = vector.shape_cast %3 : vector<1x1x2x128xf32> to vector<2x128xf32>
    %c0_4 = arith.constant 0 : index
    %c1 = arith.constant 1 : index
    %c0_5 = arith.constant 0 : index
    %c0_6 = arith.constant 0 : index
    %5 = vector.load %arg3[%c0_4, %c1, %c0_5, %c0_6] : memref<1x4x2x128xf32, #tpu.memory_space<vmem>>, vector<1x1x2x128xf32>
    %6 = vector.shape_cast %5 : vector<1x1x2x128xf32> to vector<2x128xf32>
    %c0_7 = arith.constant 0 : index
    %c2 = arith.constant 2 : index
    %c0_8 = arith.constant 0 : index
    %c0_9 = arith.constant 0 : index
    %7 = vector.load %arg3[%c0_7, %c2, %c0_8, %c0_9] : memref<1x4x2x128xf32, #tpu.memory_space<vmem>>, vector<1x1x2x128xf32>
    %8 = vector.shape_cast %7 : vector<1x1x2x128xf32> to vector<2x128xf32>
    %c0_10 = arith.constant 0 : index
    %c3 = arith.constant 3 : index
    %c0_11 = arith.constant 0 : index
    %c0_12 = arith.constant 0 : index
    %9 = vector.load %arg3[%c0_10, %c3, %c0_11, %c0_12] : memref<1x4x2x128xf32, #tpu.memory_space<vmem>>, vector<1x1x2x128xf32>
    %10 = vector.shape_cast %9 : vector<1x1x2x128xf32> to vector<2x128xf32>
    %11 = arith.maximumf %4, %6 : vector<2x128xf32>
    %12 = arith.maximumf %11, %8 : vector<2x128xf32>
    %13 = arith.maximumf %12, %10 : vector<2x128xf32>
    %14 = arith.subf %4, %13 : vector<2x128xf32>
    %15 = math.exp %14 : vector<2x128xf32>
    %16 = arith.subf %6, %13 : vector<2x128xf32>
    %17 = math.exp %16 : vector<2x128xf32>
    %18 = arith.subf %8, %13 : vector<2x128xf32>
    %19 = math.exp %18 : vector<2x128xf32>
    %20 = arith.subf %10, %13 : vector<2x128xf32>
    %21 = math.exp %20 : vector<2x128xf32>
    %22 = arith.addf %15, %17 : vector<2x128xf32>
    %23 = arith.addf %22, %19 : vector<2x128xf32>
    %24 = arith.addf %23, %21 : vector<2x128xf32>
    %25 = tpu.reciprocal %24 {approx = true} : vector<2x128xf32> -> vector<2x128xf32>
    %26 = arith.mulf %24, %25 : vector<2x128xf32>
    %cst = arith.constant 2.000000e+00 : f32
    %27 = vector.broadcast %cst : f32 to vector<2x128xf32>
    %28 = arith.subf %27, %26 : vector<2x128xf32>
    %29 = arith.mulf %25, %28 : vector<2x128xf32>
    %c0_13 = arith.constant 0 : index
    %c0_14 = arith.constant 0 : index
    %c0_15 = arith.constant 0 : index
    %c0_16 = arith.constant 0 : index
    %30 = vector.load %arg4[%c0_13, %c0_14, %c0_15, %c0_16] : memref<1x1x2x128xi32, #tpu.memory_space<vmem>>, vector<1x1x2x128xi32>
    %31 = vector.shape_cast %30 : vector<1x1x2x128xi32> to vector<2x128xi32>
    %32 = arith.mulf %15, %29 : vector<2x128xf32>
    %c0_i32_17 = arith.constant 0 : i32
    %33 = vector.broadcast %c0_i32_17 : i32 to vector<2x128xi32>
    %34 = arith.cmpi eq, %31, %33 : vector<2x128xi32>
    %35 = arith.extui %34 : vector<2x128xi1> to vector<2x128xi32>
    %36 = arith.sitofp %35 : vector<2x128xi32> to vector<2x128xf32>
    %c0_18 = arith.constant 0 : index
    %c0_19 = arith.constant 0 : index
    %c0_20 = arith.constant 0 : index
    %c0_21 = arith.constant 0 : index
    %37 = vector.load %arg5[%c0_18, %c0_19, %c0_20, %c0_21] : memref<1x12x2x128xf32, #tpu.memory_space<vmem>>, vector<1x1x2x128xf32>
    %38 = vector.shape_cast %37 : vector<1x1x2x128xf32> to vector<2x128xf32>
    %39 = arith.mulf %32, %36 : vector<2x128xf32>
    %40 = arith.addf %38, %39 : vector<2x128xf32>
    %c0_22 = arith.constant 0 : index
    %c0_23 = arith.constant 0 : index
    %c0_24 = arith.constant 0 : index
    %c0_25 = arith.constant 0 : index
    %41 = vector.load %arg5[%c0_22, %c0_23, %c0_24, %c0_25] : memref<1x12x2x128xf32, #tpu.memory_space<vmem>>, vector<1x1x2x128xf32>
    %42 = vector.shape_cast %41 : vector<1x1x2x128xf32> to vector<2x128xf32>
    %43 = vector.shape_cast %40 : vector<2x128xf32> to vector<1x1x2x128xf32>
    tpu.vector_store %arg5[%c0_22, %c0_23, %c0_24, %c0_25], %43 {strides = array<i32>} : memref<1x12x2x128xf32, #tpu.memory_space<vmem>>, vector<1x1x2x128xf32>,
    %c0_26 = arith.constant 0 : index
    %c4 = arith.constant 4 : index
    %c0_27 = arith.constant 0 : index
    %c0_28 = arith.constant 0 : index
    %44 = vector.load %arg5[%c0_26, %c4, %c0_27, %c0_28] : memref<1x12x2x128xf32, #tpu.memory_space<vmem>>, vector<1x1x2x128xf32>
    %45 = vector.shape_cast %44 : vector<1x1x2x128xf32> to vector<2x128xf32>
    %46 = arith.addf %45, %32 : vector<2x128xf32>
    %c0_29 = arith.constant 0 : index
    %c4_30 = arith.constant 4 : index
    %c0_31 = arith.constant 0 : index
    %c0_32 = arith.constant 0 : index
    %47 = vector.load %arg5[%c0_29, %c4_30, %c0_31, %c0_32] : memref<1x12x2x128xf32, #tpu.memory_space<vmem>>, vector<1x1x2x128xf32>
    %48 = vector.shape_cast %47 : vector<1x1x2x128xf32> to vector<2x128xf32>
    %49 = vector.shape_cast %46 : vector<2x128xf32> to vector<1x1x2x128xf32>
    tpu.vector_store %arg5[%c0_29, %c4_30, %c0_31, %c0_32], %49 {strides = array<i32>} : memref<1x12x2x128xf32, #tpu.memory_space<vmem>>, vector<1x1x2x128xf32>,
    %c0_33 = arith.constant 0 : index
    %c8 = arith.constant 8 : index
    %c0_34 = arith.constant 0 : index
    %c0_35 = arith.constant 0 : index
    %50 = vector.load %arg5[%c0_33, %c8, %c0_34, %c0_35] : memref<1x12x2x128xf32, #tpu.memory_space<vmem>>, vector<1x1x2x128xf32>
    %51 = vector.shape_cast %50 : vector<1x1x2x128xf32> to vector<2x128xf32>
    %52 = arith.addf %51, %36 : vector<2x128xf32>
    %c0_36 = arith.constant 0 : index
    %c8_37 = arith.constant 8 : index
    %c0_38 = arith.constant 0 : index
    %c0_39 = arith.constant 0 : index
    %53 = vector.load %arg5[%c0_36, %c8_37, %c0_38, %c0_39] : memref<1x12x2x128xf32, #tpu.memory_space<vmem>>, vector<1x1x2x128xf32>
    %54 = vector.shape_cast %53 : vector<1x1x2x128xf32> to vector<2x128xf32>
    %55 = vector.shape_cast %52 : vector<2x128xf32> to vector<1x1x2x128xf32>
    tpu.vector_store %arg5[%c0_36, %c8_37, %c0_38, %c0_39], %55 {strides = array<i32>} : memref<1x12x2x128xf32, #tpu.memory_space<vmem>>, vector<1x1x2x128xf32>,
    %56 = arith.mulf %17, %29 : vector<2x128xf32>
    %c1_i32 = arith.constant 1 : i32
    %57 = vector.broadcast %c1_i32 : i32 to vector<2x128xi32>
    %58 = arith.cmpi eq, %31, %57 : vector<2x128xi32>
    %59 = arith.extui %58 : vector<2x128xi1> to vector<2x128xi32>
    %60 = arith.sitofp %59 : vector<2x128xi32> to vector<2x128xf32>
    %c0_40 = arith.constant 0 : index
    %c1_41 = arith.constant 1 : index
    %c0_42 = arith.constant 0 : index
    %c0_43 = arith.constant 0 : index
    %61 = vector.load %arg5[%c0_40, %c1_41, %c0_42, %c0_43] : memref<1x12x2x128xf32, #tpu.memory_space<vmem>>, vector<1x1x2x128xf32>
    %62 = vector.shape_cast %61 : vector<1x1x2x128xf32> to vector<2x128xf32>
    %63 = arith.mulf %56, %60 : vector<2x128xf32>
    %64 = arith.addf %62, %63 : vector<2x128xf32>
    %c0_44 = arith.constant 0 : index
    %c1_45 = arith.constant 1 : index
    %c0_46 = arith.constant 0 : index
    %c0_47 = arith.constant 0 : index
    %65 = vector.load %arg5[%c0_44, %c1_45, %c0_46, %c0_47] : memref<1x12x2x128xf32, #tpu.memory_space<vmem>>, vector<1x1x2x128xf32>
    %66 = vector.shape_cast %65 : vector<1x1x2x128xf32> to vector<2x128xf32>
    %67 = vector.shape_cast %64 : vector<2x128xf32> to vector<1x1x2x128xf32>
    tpu.vector_store %arg5[%c0_44, %c1_45, %c0_46, %c0_47], %67 {strides = array<i32>} : memref<1x12x2x128xf32, #tpu.memory_space<vmem>>, vector<1x1x2x128xf32>,
    %c0_48 = arith.constant 0 : index
    %c5 = arith.constant 5 : index
    %c0_49 = arith.constant 0 : index
    %c0_50 = arith.constant 0 : index
    %68 = vector.load %arg5[%c0_48, %c5, %c0_49, %c0_50] : memref<1x12x2x128xf32, #tpu.memory_space<vmem>>, vector<1x1x2x128xf32>
    %69 = vector.shape_cast %68 : vector<1x1x2x128xf32> to vector<2x128xf32>
    %70 = arith.addf %69, %56 : vector<2x128xf32>
    %c0_51 = arith.constant 0 : index
    %c5_52 = arith.constant 5 : index
    %c0_53 = arith.constant 0 : index
    %c0_54 = arith.constant 0 : index
    %71 = vector.load %arg5[%c0_51, %c5_52, %c0_53, %c0_54] : memref<1x12x2x128xf32, #tpu.memory_space<vmem>>, vector<1x1x2x128xf32>
    %72 = vector.shape_cast %71 : vector<1x1x2x128xf32> to vector<2x128xf32>
    %73 = vector.shape_cast %70 : vector<2x128xf32> to vector<1x1x2x128xf32>
    tpu.vector_store %arg5[%c0_51, %c5_52, %c0_53, %c0_54], %73 {strides = array<i32>} : memref<1x12x2x128xf32, #tpu.memory_space<vmem>>, vector<1x1x2x128xf32>,
    %c0_55 = arith.constant 0 : index
    %c9 = arith.constant 9 : index
    %c0_56 = arith.constant 0 : index
    %c0_57 = arith.constant 0 : index
    %74 = vector.load %arg5[%c0_55, %c9, %c0_56, %c0_57] : memref<1x12x2x128xf32, #tpu.memory_space<vmem>>, vector<1x1x2x128xf32>
    %75 = vector.shape_cast %74 : vector<1x1x2x128xf32> to vector<2x128xf32>
    %76 = arith.addf %75, %60 : vector<2x128xf32>
    %c0_58 = arith.constant 0 : index
    %c9_59 = arith.constant 9 : index
    %c0_60 = arith.constant 0 : index
    %c0_61 = arith.constant 0 : index
    %77 = vector.load %arg5[%c0_58, %c9_59, %c0_60, %c0_61] : memref<1x12x2x128xf32, #tpu.memory_space<vmem>>, vector<1x1x2x128xf32>
    %78 = vector.shape_cast %77 : vector<1x1x2x128xf32> to vector<2x128xf32>
    %79 = vector.shape_cast %76 : vector<2x128xf32> to vector<1x1x2x128xf32>
    tpu.vector_store %arg5[%c0_58, %c9_59, %c0_60, %c0_61], %79 {strides = array<i32>} : memref<1x12x2x128xf32, #tpu.memory_space<vmem>>, vector<1x1x2x128xf32>,
    %80 = arith.mulf %19, %29 : vector<2x128xf32>
    %c2_i32 = arith.constant 2 : i32
    %81 = vector.broadcast %c2_i32 : i32 to vector<2x128xi32>
    %82 = arith.cmpi eq, %31, %81 : vector<2x128xi32>
    %83 = arith.extui %82 : vector<2x128xi1> to vector<2x128xi32>
    %84 = arith.sitofp %83 : vector<2x128xi32> to vector<2x128xf32>
    %c0_62 = arith.constant 0 : index
    %c2_63 = arith.constant 2 : index
    %c0_64 = arith.constant 0 : index
    %c0_65 = arith.constant 0 : index
    %85 = vector.load %arg5[%c0_62, %c2_63, %c0_64, %c0_65] : memref<1x12x2x128xf32, #tpu.memory_space<vmem>>, vector<1x1x2x128xf32>
    %86 = vector.shape_cast %85 : vector<1x1x2x128xf32> to vector<2x128xf32>
    %87 = arith.mulf %80, %84 : vector<2x128xf32>
    %88 = arith.addf %86, %87 : vector<2x128xf32>
    %c0_66 = arith.constant 0 : index
    %c2_67 = arith.constant 2 : index
    %c0_68 = arith.constant 0 : index
    %c0_69 = arith.constant 0 : index
    %89 = vector.load %arg5[%c0_66, %c2_67, %c0_68, %c0_69] : memref<1x12x2x128xf32, #tpu.memory_space<vmem>>, vector<1x1x2x128xf32>
    %90 = vector.shape_cast %89 : vector<1x1x2x128xf32> to vector<2x128xf32>
    %91 = vector.shape_cast %88 : vector<2x128xf32> to vector<1x1x2x128xf32>
    tpu.vector_store %arg5[%c0_66, %c2_67, %c0_68, %c0_69], %91 {strides = array<i32>} : memref<1x12x2x128xf32, #tpu.memory_space<vmem>>, vector<1x1x2x128xf32>,
    %c0_70 = arith.constant 0 : index
    %c6 = arith.constant 6 : index
    %c0_71 = arith.constant 0 : index
    %c0_72 = arith.constant 0 : index
    %92 = vector.load %arg5[%c0_70, %c6, %c0_71, %c0_72] : memref<1x12x2x128xf32, #tpu.memory_space<vmem>>, vector<1x1x2x128xf32>
    %93 = vector.shape_cast %92 : vector<1x1x2x128xf32> to vector<2x128xf32>
    %94 = arith.addf %93, %80 : vector<2x128xf32>
    %c0_73 = arith.constant 0 : index
    %c6_74 = arith.constant 6 : index
    %c0_75 = arith.constant 0 : index
    %c0_76 = arith.constant 0 : index
    %95 = vector.load %arg5[%c0_73, %c6_74, %c0_75, %c0_76] : memref<1x12x2x128xf32, #tpu.memory_space<vmem>>, vector<1x1x2x128xf32>
    %96 = vector.shape_cast %95 : vector<1x1x2x128xf32> to vector<2x128xf32>
    %97 = vector.shape_cast %94 : vector<2x128xf32> to vector<1x1x2x128xf32>
    tpu.vector_store %arg5[%c0_73, %c6_74, %c0_75, %c0_76], %97 {strides = array<i32>} : memref<1x12x2x128xf32, #tpu.memory_space<vmem>>, vector<1x1x2x128xf32>,
    %c0_77 = arith.constant 0 : index
    %c10 = arith.constant 10 : index
    %c0_78 = arith.constant 0 : index
    %c0_79 = arith.constant 0 : index
    %98 = vector.load %arg5[%c0_77, %c10, %c0_78, %c0_79] : memref<1x12x2x128xf32, #tpu.memory_space<vmem>>, vector<1x1x2x128xf32>
    %99 = vector.shape_cast %98 : vector<1x1x2x128xf32> to vector<2x128xf32>
    %100 = arith.addf %99, %84 : vector<2x128xf32>
    %c0_80 = arith.constant 0 : index
    %c10_81 = arith.constant 10 : index
    %c0_82 = arith.constant 0 : index
    %c0_83 = arith.constant 0 : index
    %101 = vector.load %arg5[%c0_80, %c10_81, %c0_82, %c0_83] : memref<1x12x2x128xf32, #tpu.memory_space<vmem>>, vector<1x1x2x128xf32>
    %102 = vector.shape_cast %101 : vector<1x1x2x128xf32> to vector<2x128xf32>
    %103 = vector.shape_cast %100 : vector<2x128xf32> to vector<1x1x2x128xf32>
    tpu.vector_store %arg5[%c0_80, %c10_81, %c0_82, %c0_83], %103 {strides = array<i32>} : memref<1x12x2x128xf32, #tpu.memory_space<vmem>>, vector<1x1x2x128xf32>,
    %104 = arith.mulf %21, %29 : vector<2x128xf32>
    %c3_i32 = arith.constant 3 : i32
    %105 = vector.broadcast %c3_i32 : i32 to vector<2x128xi32>
    %106 = arith.cmpi eq, %31, %105 : vector<2x128xi32>
    %107 = arith.extui %106 : vector<2x128xi1> to vector<2x128xi32>
    %108 = arith.sitofp %107 : vector<2x128xi32> to vector<2x128xf32>
    %c0_84 = arith.constant 0 : index
    %c3_85 = arith.constant 3 : index
    %c0_86 = arith.constant 0 : index
    %c0_87 = arith.constant 0 : index
    %109 = vector.load %arg5[%c0_84, %c3_85, %c0_86, %c0_87] : memref<1x12x2x128xf32, #tpu.memory_space<vmem>>, vector<1x1x2x128xf32>
    %110 = vector.shape_cast %109 : vector<1x1x2x128xf32> to vector<2x128xf32>
    %111 = arith.mulf %104, %108 : vector<2x128xf32>
    %112 = arith.addf %110, %111 : vector<2x128xf32>
    %c0_88 = arith.constant 0 : index
    %c3_89 = arith.constant 3 : index
    %c0_90 = arith.constant 0 : index
    %c0_91 = arith.constant 0 : index
    %113 = vector.load %arg5[%c0_88, %c3_89, %c0_90, %c0_91] : memref<1x12x2x128xf32, #tpu.memory_space<vmem>>, vector<1x1x2x128xf32>
    %114 = vector.shape_cast %113 : vector<1x1x2x128xf32> to vector<2x128xf32>
    %115 = vector.shape_cast %112 : vector<2x128xf32> to vector<1x1x2x128xf32>
    tpu.vector_store %arg5[%c0_88, %c3_89, %c0_90, %c0_91], %115 {strides = array<i32>} : memref<1x12x2x128xf32, #tpu.memory_space<vmem>>, vector<1x1x2x128xf32>,
    %c0_92 = arith.constant 0 : index
    %c7 = arith.constant 7 : index
    %c0_93 = arith.constant 0 : index
    %c0_94 = arith.constant 0 : index
    %116 = vector.load %arg5[%c0_92, %c7, %c0_93, %c0_94] : memref<1x12x2x128xf32, #tpu.memory_space<vmem>>, vector<1x1x2x128xf32>
    %117 = vector.shape_cast %116 : vector<1x1x2x128xf32> to vector<2x128xf32>
    %118 = arith.addf %117, %104 : vector<2x128xf32>
    %c0_95 = arith.constant 0 : index
    %c7_96 = arith.constant 7 : index
    %c0_97 = arith.constant 0 : index
    %c0_98 = arith.constant 0 : index
    %119 = vector.load %arg5[%c0_95, %c7_96, %c0_97, %c0_98] : memref<1x12x2x128xf32, #tpu.memory_space<vmem>>, vector<1x1x2x128xf32>
    %120 = vector.shape_cast %119 : vector<1x1x2x128xf32> to vector<2x128xf32>
    %121 = vector.shape_cast %118 : vector<2x128xf32> to vector<1x1x2x128xf32>
    tpu.vector_store %arg5[%c0_95, %c7_96, %c0_97, %c0_98], %121 {strides = array<i32>} : memref<1x12x2x128xf32, #tpu.memory_space<vmem>>, vector<1x1x2x128xf32>,
    %c0_99 = arith.constant 0 : index
    %c11 = arith.constant 11 : index
    %c0_100 = arith.constant 0 : index
    %c0_101 = arith.constant 0 : index
    %122 = vector.load %arg5[%c0_99, %c11, %c0_100, %c0_101] : memref<1x12x2x128xf32, #tpu.memory_space<vmem>>, vector<1x1x2x128xf32>
    %123 = vector.shape_cast %122 : vector<1x1x2x128xf32> to vector<2x128xf32>
    %124 = arith.addf %123, %108 : vector<2x128xf32>
    %c0_102 = arith.constant 0 : index
    %c11_103 = arith.constant 11 : index
    %c0_104 = arith.constant 0 : index
    %c0_105 = arith.constant 0 : index
    %125 = vector.load %arg5[%c0_102, %c11_103, %c0_104, %c0_105] : memref<1x12x2x128xf32, #tpu.memory_space<vmem>>, vector<1x1x2x128xf32>
    %126 = vector.shape_cast %125 : vector<1x1x2x128xf32> to vector<2x128xf32>
    %127 = vector.shape_cast %124 : vector<2x128xf32> to vector<1x1x2x128xf32>
    tpu.vector_store %arg5[%c0_102, %c11_103, %c0_104, %c0_105], %127 {strides = array<i32>} : memref<1x12x2x128xf32, #tpu.memory_space<vmem>>, vector<1x1x2x128xf32>,
    return
  }
  func.func @transform_0(%arg0: i32, %arg1: i32, %arg2: i32) -> (i32, i32, i32, i32) {
    %c1_i32 = arith.constant 1 : i32
    %0 = arith.muli %arg1, %c1_i32 : i32
    %1 = arith.addi %0, %arg2 : i32
    %c0_i32 = arith.constant 0 : i32
    %c0_i32_0 = arith.constant 0 : i32
    %c0_i32_1 = arith.constant 0 : i32
    return %arg0, %c0_i32, %1, %c0_i32_0 : i32, i32, i32, i32
  }
  func.func @transform_1(%arg0: i32, %arg1: i32, %arg2: i32) -> (i32, i32, i32, i32) {
    %c1_i32 = arith.constant 1 : i32
    %0 = arith.muli %arg1, %c1_i32 : i32
    %1 = arith.addi %0, %arg2 : i32
    %c0_i32 = arith.constant 0 : i32
    %c0_i32_0 = arith.constant 0 : i32
    %c0_i32_1 = arith.constant 0 : i32
    return %arg0, %c0_i32, %1, %c0_i32_0 : i32, i32, i32, i32
  }
  func.func @transform_2(%arg0: i32, %arg1: i32, %arg2: i32) -> (i32, i32, i32, i32) {
    %c1_i32 = arith.constant 1 : i32
    %0 = arith.muli %arg0, %c1_i32 : i32
    %1 = arith.addi %0, %arg1 : i32
    %c0_i32 = arith.constant 0 : i32
    %c0_i32_0 = arith.constant 0 : i32
    %c0_i32_1 = arith.constant 0 : i32
    %c0_i32_2 = arith.constant 0 : i32
    return %1, %c0_i32, %c0_i32_0, %c0_i32_1 : i32, i32, i32, i32
  }
}

</mosaic_0001>

<llo_original>
// kernel: dice_loss.1
$region0: #{dice_loss.1}
  #allocation0 [shape = 'u32[]', space=smem, size = 0x4, offset = 0x4, fixed_abs, tag = 'smem constant byte address 0x4 - core index']
  #allocation1 [shape = 'u32[144,128]{1,0:T(1,128)}', space=vmem, size = 0x12000, scoped, tag = 'internal scratch']
  %s0 = inlined_call_operand.vmem [shape: f32[2,4,2,128], index: 0, kind: input, shape index: {}]
  %s1 = inlined_call_operand.vmem [shape: s32[2,1,2,128], index: 1, kind: input, shape index: {}]
  %s2 = inlined_call_operand.vmem [shape: f32[2,12,2,128], index: 2, kind: output, shape index: {}]
  %s3 = sld [smem:[#allocation0]]
  $region45: #{dice_loss.1} parent=0
    _
  %s5 = ssub.s32 1, %s3
  %s6 = scalar_select 0, %s5, %s3
  loop: start=0, step=1, limit=4
  $region2: #{dice_loss.1} parent=0 // loop_pre_header
    _
  $region3: #{dice_loss.1} parent=0 // loop_header
    %s8 = sphi 0, %s12
    %p9 = scmp.ge.s32.totalorder %s8, 4
    %s15 = sphi 0, %s34
    %s16 = sphi 0, %s30
    %s17 = sphi 0, %s26
    %s18 = sphi 0, %s15
    %s19 = sphi 0, %s16
    %s20 = sphi 0, %s17
    %s21 = sphi 0, %s18
    %s22 = sphi 0, %s19
    %s23 = sphi 0, %s20
    %s41 = sphi 0, %s43
    %s44 = sphi 0, %s41
    %s45 = sphi 0, %s44
    %s61 = sphi 0, %s45
    %s71 = sphi 0, %s73
    %s74 = sphi 0, %s71
    %s75 = sphi 0, %s74
    %s91 = sphi 0, %s75
    %s99 = sphi 0, %s101
    %s102 = sphi 0, %s99
    %s103 = sphi 0, %s102
    %s119 = sphi 0, %s103
  $region4: #{dice_loss.1} parent=0 // loop_header_branch
    %11 = sbr.rel (%p9) target = $region8
  $region5: #{dice_loss.1} parent=0 // loop_body
    %s13 = ssub.s32 %s8, 1
    %s14 = ssub.s32 %s8, 2
    %s24 = sadd.s32 1, %s17
    %p25 = scmp.ge.s32.totalorder %s24, 1
    %s26 = scalar_select %p25, 0, %s24
    %s27 = sadd.s32 1, %s16
    %s28 = scalar_select %p25, %s27, %s16
    %p29 = scmp.ge.s32.totalorder %s28, 1
    %s30 = scalar_select %p29, 0, %s28
    %s31 = sadd.s32 1, %s15
    %s32 = scalar_select %p29, %s31, %s15
    %p33 = scmp.ge.s32.totalorder %s32, 2
    %s34 = scalar_select %p33, 0, %s32
    %s35 = sadd.s32 %s16, %s17
    %s36 = sadd.s32 %s30, %s26
    %s37 = ssub.s32 %s15, %s34
    %s38 = ssub.s32 %s35, %s36
    %s39 = sor.u32 %s37, %s38
    %p40 = scmp.eq.s32.totalorder %s39, 0
    %s42 = sadd.s32 %s41, 1
    %s43 = scalar_select %p40, %s41, %s42
    %p46 = pneg %p40
    %p47 = scmp.eq.s32.totalorder %s8, 1
    %p48 = por %p46, %p47
    %p49 = scmp.ne.s32.totalorder %s41, %s44
    %p50 = scmp.eq.s32.totalorder %s8, 0
    %p51 = por %p49, %p50
    %p52 = scmp.ne.s32.totalorder %s41, %s44
    %p53 = scmp.eq.s32.totalorder %s13, 1
    %p54 = por %p52, %p53
    %p55 = scmp.ne.s32.totalorder %s44, %s45
    %p56 = scmp.eq.s32.totalorder %s13, 0
    %p57 = por %p55, %p56
    %p58 = scmp.ne.s32.totalorder %s44, %s45
    %p59 = scmp.eq.s32.totalorder %s14, 1
    %p60 = por %p58, %p59
    %p62 = scmp.ne.s32.totalorder %s45, %s61
    %p63 = scmp.eq.s32.totalorder %s14, 0
    %p64 = por %p62, %p63
    %s65 = sadd.s32 %s16, %s17
    %s66 = sadd.s32 %s30, %s26
    %s67 = ssub.s32 %s15, %s34
    %s68 = ssub.s32 %s65, %s66
    %s69 = sor.u32 %s67, %s68
    %p70 = scmp.eq.s32.totalorder %s69, 0
    %s72 = sadd.s32 %s71, 1
    %s73 = scalar_select %p70, %s71, %s72
    %p76 = pneg %p70
    %p77 = scmp.eq.s32.totalorder %s8, 1
    %p78 = por %p76, %p77
    %p79 = scmp.ne.s32.totalorder %s71, %s74
    %p80 = scmp.eq.s32.totalorder %s8, 0
    %p81 = por %p79, %p80
    %p82 = scmp.ne.s32.totalorder %s71, %s74
    %p83 = scmp.eq.s32.totalorder %s13, 1
    %p84 = por %p82, %p83
    %p85 = scmp.ne.s32.totalorder %s74, %s75
    %p86 = scmp.eq.s32.totalorder %s13, 0
    %p87 = por %p85, %p86
    %p88 = scmp.ne.s32.totalorder %s74, %s75
    %p89 = scmp.eq.s32.totalorder %s14, 1
    %p90 = por %p88, %p89
    %p92 = scmp.ne.s32.totalorder %s75, %s91
    %p93 = scmp.eq.s32.totalorder %s14, 0
    %p94 = por %p92, %p93
    %s95 = sadd.s32 %s15, %s16
    %s96 = sadd.s32 %s34, %s30
    %s97 = ssub.s32 %s95, %s96
    %p98 = scmp.eq.s32.totalorder %s97, 0
    %s100 = sadd.s32 %s99, 1
    %s101 = scalar_select %p98, %s99, %s100
    %p104 = pneg %p98
    %p105 = scmp.eq.s32.totalorder %s8, 1
    %p106 = por %p104, %p105
    %p107 = scmp.ne.s32.totalorder %s99, %s102
    %p108 = scmp.eq.s32.totalorder %s8, 0
    %p109 = por %p107, %p108
    %p110 = scmp.ne.s32.totalorder %s99, %s102
    %p111 = scmp.eq.s32.totalorder %s13, 1
    %p112 = por %p110, %p111
    %p113 = scmp.ne.s32.totalorder %s102, %s103
    %p114 = scmp.eq.s32.totalorder %s13, 0
    %p115 = por %p113, %p114
    %p116 = scmp.ne.s32.totalorder %s102, %s103
    %p117 = scmp.eq.s32.totalorder %s14, 1
    %p118 = por %p116, %p117
    %p120 = scmp.ne.s32.totalorder %s103, %s119
    %p121 = scmp.eq.s32.totalorder %s14, 0
    %p122 = por %p120, %p121
    %p123 = scmp.le.s32.totalorder 1, %s8
    %p124 = scmp.lt.s32.totalorder %s8, 3
    %p125 = pnand %p123, %p124
    %p126 = pneg %p125
    // Predicated region
    $region9: #{dice_loss.1} parent=5 // pred_check
      _
    $region10: #{dice_loss.1} parent=5 // pred_check_branch
      %128 = sbr.rel (%p125) target = $region12
    $region11: #{dice_loss.1} parent=5 // pred_region
      %s129 = ssub.s32 %s8, 1
    $region12: #{dice_loss.1} parent=5 // pred_fallthru
      _
    %p130 = scmp.lt.s32.totalorder %s8, 2
    // Predicated region
    $region13: #{dice_loss.1} parent=5 // pred_check
      %p131 = pneg %p130
    $region14: #{dice_loss.1} parent=5 // pred_check_branch
      %133 = sbr.rel (%p131) target = $region16
    $region15: #{dice_loss.1} parent=5 // pred_region
      // Predicated region
      $region17: #{dice_loss.1} parent=15 // pred_check
        %p134 = pneg %p51
      $region18: #{dice_loss.1} parent=15 // pred_check_branch
        %136 = sbr.rel (%p134) target = $region20
      $region19: #{dice_loss.1} parent=15 // pred_region
        %s137 = sadd.s32 %s16, %s17
        %p138 = scmp.lt.s32.totalorder %s15, 1
        %s139 = scalar_select %p138, %s15, 1
        %p140 = scmp.lt.s32.totalorder %s137, 0
        %s141 = scalar_select %p140, %s137, 0
        %s142 = smul.addr %s139, 4
        %s143 = sadd.s32 %s141, %s142
        %s144 = smul.addr %s143, 2
        %s145 = scalar_lea.vmem %s0, %s144
        %s146 = sadd.s32 %s16, %s17
      $region20: #{dice_loss.1} parent=15 // pred_fallthru
        _
      // Predicated region
      $region21: #{dice_loss.1} parent=15 // pred_check
        %p147 = pneg %p81
      $region22: #{dice_loss.1} parent=15 // pred_check_branch
        %149 = sbr.rel (%p147) target = $region24
      $region23: #{dice_loss.1} parent=15 // pred_region
        %s150 = sadd.s32 %s16, %s17
        %p151 = scmp.lt.s32.totalorder %s15, 1
        %s152 = scalar_select %p151, %s15, 1
        %p153 = scmp.lt.s32.totalorder %s150, 0
        %s154 = scalar_select %p153, %s150, 0
        %s155 = sadd.s32 %s154, %s152
        %s156 = smul.addr %s155, 2
        %s157 = scalar_lea.vmem %s1, %s156
        %s158 = sadd.s32 %s16, %s17
      $region24: #{dice_loss.1} parent=15 // pred_fallthru
        _
    $region16: #{dice_loss.1} parent=5 // pred_fallthru
      _
    %p159 = scmp.le.s32.totalorder 1, %s8
    %p160 = scmp.lt.s32.totalorder %s8, 3
    %p161 = pnand %p159, %p160
    %p162 = pneg %p161
    // Predicated region
    $region25: #{dice_loss.1} parent=5 // pred_check
      _
    $region26: #{dice_loss.1} parent=5 // pred_check_branch
      %164 = sbr.rel (%p161) target = $region28
    $region27: #{dice_loss.1} parent=5 // pred_region
      %s165 = ssub.s32 %s8, 1
      %s166 = sadd.s32 %s19, %s20
      %p167 = scmp.lt.s32.totalorder %s18, 1
      %s168 = scalar_select %p167, %s18, 1
      %p169 = scmp.lt.s32.totalorder %s166, 0
      %s170 = scalar_select %p169, %s166, 0
      %s171 = smul.addr %s168, 4
      %s172 = sadd.s32 %s170, %s171
      %s173 = smul.addr %s172, 2
      %s174 = scalar_lea.vmem %s0, %s173
      %p175 = pneg %p57
      %p176 = pneg %p54
      %s177 = sadd.s32 %s19, %s20
      %p178 = scmp.lt.s32.totalorder %s18, 1
      %s179 = scalar_select %p178, %s18, 1
      %p180 = scmp.lt.s32.totalorder %s177, 0
      %s181 = scalar_select %p180, %s177, 0
      %s182 = sadd.s32 %s181, %s179
      %s183 = smul.addr %s182, 2
      %s184 = scalar_lea.vmem %s1, %s183
      %p185 = pneg %p87
      %p186 = pneg %p84
      %p187 = pneg %p115
      %p188 = pneg %p112
      %s189 = sadd.s32 %s18, %s19
      %p190 = scmp.lt.s32.totalorder %s189, 1
      %s191 = scalar_select %p190, %s189, 1
      %s192 = smul.addr %s191, 12
      %s193 = smul.addr %s192, 2
      %s194 = scalar_lea.vmem %s2, %s193
      %s195 = sadd.s32 %s19, %s20
      %p196 = scmp.lt.s32.totalorder %s18, 1
      %s197 = scalar_select %p196, %s18, 1
      %p198 = scmp.lt.s32.totalorder %s195, 0
      %s199 = scalar_select %p198, %s195, 0
      %s200 = smul.addr %s197, 4
      %s201 = sadd.s32 %s199, %s200
      %s202 = smul.addr %s201, 2
      %s203 = scalar_lea.vmem %s0, %s202
      %s204 = sadd.s32 %s19, %s20
      %s205 = sadd.s32 %s19, %s20
      %p206 = scmp.lt.s32.totalorder %s18, 1
      %s207 = scalar_select %p206, %s18, 1
      %p208 = scmp.lt.s32.totalorder %s205, 0
      %s209 = scalar_select %p208, %s205, 0
      %s210 = sadd.s32 %s209, %s207
      %s211 = smul.addr %s210, 2
      %s212 = scalar_lea.vmem %s1, %s211
      %s213 = sadd.s32 %s19, %s20
      %s214 = sadd.s32 %s18, %s19
      %p215 = scmp.lt.s32.totalorder %s214, 1
      %s216 = scalar_select %p215, %s214, 1
      %s217 = smul.addr %s216, 12
      %s218 = smul.addr %s217, 2
      %s219 = scalar_lea.vmem %s2, %s218
      %s220 = sadd.s32 %s18, %s19
      %p221 = scmp.eq.s32.totalorder %s20, 0
      // Predicated region
      $region29: #{dice_loss.1} parent=27 // pred_check
        %p222 = pneg %p221
      $region30: #{dice_loss.1} parent=27 // pred_check_branch
        %224 = sbr.rel (%p222) target = $region32
      $region31: #{dice_loss.1} parent=27 // pred_region
        %225 = vst [vmem:[%s219] sm:$0x3] 0.0
        %226 = vst [vmem:[%s219 + $0x2] sm:$0x3] 0.0
        %227 = vst [vmem:[%s219 + $0x4] sm:$0x3] 0.0
        %228 = vst [vmem:[%s219 + $0x6] sm:$0x3] 0.0
        %229 = vst [vmem:[%s219 + $0x8] sm:$0x3] 0.0
        %230 = vst [vmem:[%s219 + $0xa] sm:$0x3] 0.0
        %231 = vst [vmem:[%s219 + $0xc] sm:$0x3] 0.0
        %232 = vst [vmem:[%s219 + $0xe] sm:$0x3] 0.0
        %233 = vst [vmem:[%s219 + $0x10] sm:$0x3] 0.0
        %234 = vst [vmem:[%s219 + $0x12] sm:$0x3] 0.0
        %235 = vst [vmem:[%s219 + $0x14] sm:$0x3] 0.0
        %236 = vst [vmem:[%s219 + $0x16] sm:$0x3] 0.0
      $region32: #{dice_loss.1} parent=27 // pred_fallthru
        _
      %v237 = vld [vmem:[%s203] sm:$0x3]
      %s238 = scalar_lea.vmem %s203, 2
      %v239 = vld [vmem:[%s238] sm:$0x3]
      %s240 = scalar_lea.vmem %s203, 4
      %v241 = vld [vmem:[%s240] sm:$0x3]
      %s242 = scalar_lea.vmem %s203, 6
      %v243 = vld [vmem:[%s242] sm:$0x3]
      %v244 = vmax.f32 %v237, %v239
      %v245 = vmax.f32 %v244, %v241
      %v246 = vmax.f32 %v245, %v243
      %v247 = vsub.f32 %v237, %v246
      %v248 = vmul.f32 %v247, 1.442695
      %v249 = vpow.pop %v248
      %v250 = vsub.f32 %v239, %v246
      %v251 = vmul.f32 %v250, 1.442695
      %v252 = vpow.pop %v251
      %v253 = vsub.f32 %v241, %v246
      %v254 = vmul.f32 %v253, 1.442695
      %v255 = vpow.pop %v254
      %v256 = vsub.f32 %v243, %v246
      %v257 = vmul.f32 %v256, 1.442695
      %v258 = vpow.pop %v257
      %v259 = vadd.f32 %v249, %v252
      %v260 = vadd.f32 %v259, %v255
      %v261 = vadd.f32 %v260, %v258
      %v262 = vrcp.pop %v261
      %v263 = vmul.f32 %v261, %v262
      %v264 = vsub.f32 2.0, %v263
      %v265 = vmul.f32 %v262, %v264
      %v266 = vld [vmem:[%s212] sm:$0x3]
      %v267 = vmul.f32 %v249, %v265
      %vm268 = vcmp.eq.s32.totalorder %v266, 0
      %v269 = vsel %vm268, 1, 0
      %v270 = vcvt.s32.f32 %v269
      %v271 = vld [vmem:[%s219] sm:$0x3]
      %v272 = vmul.f32 %v267, %v270
      %v273 = vadd.f32 %v271, %v272
      %274 = vst [vmem:[%s219] sm:$0x3] %v273
      %s275 = scalar_lea.vmem %s219, 8
      %v276 = vld [vmem:[%s275] sm:$0x3]
      %v277 = vadd.f32 %v276, %v267
      %278 = vst [vmem:[%s275] sm:$0x3] %v277
      %s279 = scalar_lea.vmem %s219, 16
      %v280 = vld [vmem:[%s279] sm:$0x3]
      %v281 = vadd.f32 %v280, %v270
      %282 = vst [vmem:[%s279] sm:$0x3] %v281
      %v283 = vmul.f32 %v252, %v265
      %vm284 = vcmp.eq.s32.totalorder %v266, 1
      %v285 = vsel %vm284, 1, 0
      %v286 = vcvt.s32.f32 %v285
      %s287 = scalar_lea.vmem %s219, 2
      %v288 = vld [vmem:[%s287] sm:$0x3]
      %v289 = vmul.f32 %v283, %v286
      %v290 = vadd.f32 %v288, %v289
      %291 = vst [vmem:[%s287] sm:$0x3] %v290
      %s292 = scalar_lea.vmem %s219, 10
      %v293 = vld [vmem:[%s292] sm:$0x3]
      %v294 = vadd.f32 %v293, %v283
      %295 = vst [vmem:[%s292] sm:$0x3] %v294
      %s296 = scalar_lea.vmem %s219, 18
      %v297 = vld [vmem:[%s296] sm:$0x3]
      %v298 = vadd.f32 %v297, %v286
      %299 = vst [vmem:[%s296] sm:$0x3] %v298
      %v300 = vmul.f32 %v255, %v265
      %vm301 = vcmp.eq.s32.totalorder %v266, 2
      %v302 = vsel %vm301, 1, 0
      %v303 = vcvt.s32.f32 %v302
      %s304 = scalar_lea.vmem %s219, 4
      %v305 = vld [vmem:[%s304] sm:$0x3]
      %v306 = vmul.f32 %v300, %v303
      %v307 = vadd.f32 %v305, %v306
      %308 = vst [vmem:[%s304] sm:$0x3] %v307
      %s309 = scalar_lea.vmem %s219, 12
      %v310 = vld [vmem:[%s309] sm:$0x3]
      %v311 = vadd.f32 %v310, %v300
      %312 = vst [vmem:[%s309] sm:$0x3] %v311
      %s313 = scalar_lea.vmem %s219, 20
      %v314 = vld [vmem:[%s313] sm:$0x3]
      %v315 = vadd.f32 %v314, %v303
      %316 = vst [vmem:[%s313] sm:$0x3] %v315
      %v317 = vmul.f32 %v258, %v265
      %vm318 = vcmp.eq.s32.totalorder %v266, 3
      %v319 = vsel %vm318, 1, 0
      %v320 = vcvt.s32.f32 %v319
      %s321 = scalar_lea.vmem %s219, 6
      %v322 = vld [vmem:[%s321] sm:$0x3]
      %v323 = vmul.f32 %v317, %v320
      %v324 = vadd.f32 %v322, %v323
      %325 = vst [vmem:[%s321] sm:$0x3] %v324
      %s326 = scalar_lea.vmem %s219, 14
      %v327 = vld [vmem:[%s326] sm:$0x3]
      %v328 = vadd.f32 %v327, %v317
      %329 = vst [vmem:[%s326] sm:$0x3] %v328
      %s330 = scalar_lea.vmem %s219, 22
      %v331 = vld [vmem:[%s330] sm:$0x3]
      %v332 = vadd.f32 %v331, %v320
      %333 = vst [vmem:[%s330] sm:$0x3] %v332
      %s334 = sadd.s32 %s18, %s19
      %p335 = scmp.lt.s32.totalorder %s334, 1
      %s336 = scalar_select %p335, %s334, 1
      %s337 = smul.addr %s336, 12
      %s338 = smul.addr %s337, 2
      %s339 = scalar_lea.vmem %s2, %s338
      // Predicated region
      $region33: #{dice_loss.1} parent=27 // pred_check
        %p340 = pneg %p112
      $region34: #{dice_loss.1} parent=27 // pred_check_branch
        %342 = sbr.rel (%p340) target = $region36
      $region35: #{dice_loss.1} parent=27 // pred_region
        %s343 = sadd.s32 %s18, %s19
      $region36: #{dice_loss.1} parent=27 // pred_fallthru
        _
    $region28: #{dice_loss.1} parent=5 // pred_fallthru
      _
    %p344 = scmp.le.s32.totalorder 2, %s8
    // Predicated region
    $region37: #{dice_loss.1} parent=5 // pred_check
      %p345 = pneg %p344
    $region38: #{dice_loss.1} parent=5 // pred_check_branch
      %347 = sbr.rel (%p345) target = $region40
    $region39: #{dice_loss.1} parent=5 // pred_region
      %s348 = ssub.s32 %s8, 2
      // Predicated region
      $region41: #{dice_loss.1} parent=39 // pred_check
        %p349 = pneg %p118
      $region42: #{dice_loss.1} parent=39 // pred_check_branch
        %351 = sbr.rel (%p349) target = $region44
      $region43: #{dice_loss.1} parent=39 // pred_region
        %s352 = sadd.s32 %s21, %s22
        %p353 = scmp.lt.s32.totalorder %s352, 1
        %s354 = scalar_select %p353, %s352, 1
        %s355 = smul.addr %s354, 12
        %s356 = smul.addr %s355, 2
        %s357 = scalar_lea.vmem %s2, %s356
      $region44: #{dice_loss.1} parent=39 // pred_fallthru
        _
    $region40: #{dice_loss.1} parent=5 // pred_fallthru
      _
  $region6: #{dice_loss.1} parent=0 // loop_footer
    %s12 = sadd.s32 1, %s8
  $region7: #{dice_loss.1} parent=0 // loop_footer_branch
    %7 = sbr.rel target = $region3
  $region8: #{dice_loss.1} parent=0 // loop_exit
    _

</llo_original>
